<compile_context>
chip_gen: v5e
topology: v5e:2x2
jax: 0.10.0
libtpu: 0.0.40
codegen_flags: <defaults>
</compile_context>

<pallas_src>
import functools

import jax
import jax.numpy as jnp
from jax.experimental import pallas as pl
from jax.experimental.pallas import tpu as pltpu

LANES = 128
CHUNK_ROWS = 512        # inner streaming chunk: 512 x 128 x 4 B = 256 KiB (f32)
MAX_BLOCK_ROWS = 8192   # per-grid-step block: 4 MiB per f32 input stream


def _round_up(a, b):
    return ((a + b - 1) // b) * b


def _dice_partials_kernel(x_ref, t_ref, o_ref, *, nb, block_rows, chunk_rows,
                          tail_valid):
    """Writes per-block, per-lane partial sums of (p*t, p, t) into o_ref."""
    blk = pl.program_id(0)
    block_elems = block_rows * LANES
    n_chunks = block_rows // chunk_rows

    def fold(a):  # (chunk_rows, 128) -> (8, 128); pure VPU adds, no XLU
        return jnp.sum(a.reshape(chunk_rows // 8, 8, LANES), axis=0)

    def accumulate(masked):
        def body(c, carry):
            acc_pt, acc_p, acc_t = carry
            r0 = c * chunk_rows
            if not isinstance(r0, int):
                r0 = pl.multiple_of(r0, chunk_rows)
            x = x_ref[pl.ds(r0, chunk_rows), :].astype(jnp.float32)
            t = t_ref[pl.ds(r0, chunk_rows), :].astype(jnp.float32)
            # sigmoid(x) = 0.5 * (tanh(x/2) + 1): one EUP op + two VPU ops;
            # result is already in [0, 1] so the reference clamp is a no-op.
            p = 0.5 * (jnp.tanh(0.5 * x) + 1.0)
            if masked:
                # Only the final grid block ever contains wrapper lane-padding
                # or Pallas partial-last-block OOB rows; jnp.where keeps
                # undefined data (even NaN) out of the sums.
                row = jax.lax.broadcasted_iota(jnp.int32, p.shape, 0)
                col = jax.lax.broadcasted_iota(jnp.int32, p.shape, 1)
                valid = ((r0 + row) * LANES + col) < tail_valid
                p = jnp.where(valid, p, 0.0)
                t = jnp.where(valid, t, 0.0)
            return (acc_pt + fold(p * t), acc_p + fold(p), acc_t + fold(t))

        zero = jnp.zeros((8, LANES), jnp.float32)
        if n_chunks == 1:
            acc_pt, acc_p, acc_t = body(0, (zero, zero, zero))
        else:
            acc_pt, acc_p, acc_t = jax.lax.fori_loop(
                0, n_chunks, body, (zero, zero, zero))
        o_ref[0, 0] = acc_pt   # intersection partial
        o_ref[0, 1] = acc_p    # sum(sigmoid(x)) partial
        o_ref[0, 2] = acc_t    # sum(targets) partial

    if tail_valid < block_elems:
        # Mask is only ever built (and executed) for the final block.
        @pl.when(blk < nb - 1)
        def _full():
            accumulate(masked=False)

        @pl.when(blk == nb - 1)
        def _ragged():
            accumulate(masked=True)
    else:
        accumulate(masked=False)


def dice_loss(inputs, targets, smooth=1.0):
    """Pallas TPU implementation of DiceLoss.forward. Returns a scalar f32.

    The kernel is HBM-bandwidth bound on v5e/v6e/v7x: callers should pass
    bf16 activations and bf16/int8 targets where possible — the cast to f32
    happens inside the kernel, so narrower inputs directly halve HBM traffic.
    """
    x = jnp.reshape(inputs, (-1,))
    t = jnp.reshape(targets, (-1,))
    assert x.shape == t.shape, "inputs and targets must have the same numel"
    n = x.shape[0]
    if n == 0:
        # intersection = sums = 0  ->  dice = smooth / smooth = 1  ->  loss = 0
        return jnp.float32(0.0)

    rows = pl.cdiv(n, LANES)

    # Block sizing: biggest blocks that amortize per-step overhead while
    # (a) keeping nb >= 2 when there is enough work (v7x megacore sharding of
    # the "parallel" axis) and (b) bounding in-kernel temporaries via the
    # CHUNK_ROWS inner accumulation loop.
    if rows <= 2 * CHUNK_ROWS:
        if rows < 64:
            # Tiny input: one full-extent block; round rows up to the f32
            # sublane quantum so the in-kernel (., 8, 128) fold stays legal.
            block_rows = _round_up(rows, 8)
        else:
            block_rows = _round_up(pl.cdiv(rows, 2), 32)   # nb == 2
        chunk_rows = block_rows
    else:
        block_rows = min(MAX_BLOCK_ROWS, _round_up(pl.cdiv(rows, 2), CHUNK_ROWS))
        chunk_rows = CHUNK_ROWS
    assert chunk_rows % 8 == 0 and block_rows % chunk_rows == 0

    rows_alloc = max(rows, block_rows)       # > rows only on the tiny path
    n_padded = rows_alloc * LANES
    if n_padded != n:
        # Copy only when numel % 128 != 0 (rare for (B,C,H,W)) or the input is
        # tiny; padded elements are masked in-kernel, so sigmoid(0)=0.5 on the
        # pad never pollutes the sums.
        x = jnp.pad(x, (0, n_padded - n))
        t = jnp.pad(t, (0, n_padded - n))
    x = x.reshape(rows_alloc, LANES)
    t = t.reshape(rows_alloc, LANES)

    nb = pl.cdiv(rows_alloc, block_rows)
    tail_valid = n - (nb - 1) * block_rows * LANES  # valid elems in last block

    kernel = functools.partial(
        _dice_partials_kernel, nb=nb, block_rows=block_rows,
        chunk_rows=chunk_rows, tail_valid=tail_valid)

    cost = pl.CostEstimate(
        flops=5 * n,
        transcendentals=n,
        bytes_accessed=(x.size * x.dtype.itemsize + t.size * t.dtype.itemsize
                        + nb * 3 * 8 * LANES * 4))

    partials = pl.pallas_call(
        kernel,
        out_shape=jax.ShapeDtypeStruct((nb, 3, 8, LANES), jnp.float32),
        grid_spec=pltpu.PrefetchScalarGridSpec(
            num_scalar_prefetch=0,
            grid=(nb,),
            in_specs=[
                pl.BlockSpec((block_rows, LANES), lambda b: (b, 0)),
                pl.BlockSpec((block_rows, LANES), lambda b: (b, 0)),
            ],
            out_specs=pl.BlockSpec((1, 3, 8, LANES), lambda b: (b, 0, 0, 0)),
        ),
        compiler_params=pltpu.CompilerParams(
            dimension_semantics=("parallel",),  # v7x: shard blocks across both TCs
            vmem_limit_bytes=40 * 1024 * 1024,
        ),
        cost_estimate=cost,
    )(x, t)

    inter = jnp.sum(partials[:, 0])
    p_sum = jnp.sum(partials[:, 1])
    t_sum = jnp.sum(partials[:, 2])
    smooth = jnp.float32(smooth)
    dice = (2.0 * inter + smooth) / (p_sum + t_sum + smooth)
    return (1.0 - dice).astype(jnp.float32)


def dice_loss_ref(inputs, targets, smooth=1.0):
    p = jax.nn.sigmoid(inputs.astype(jnp.float32)).reshape(-1)
    p = jnp.clip(p, 0.0, 1.0)
    t = targets.astype(jnp.float32).reshape(-1)
    inter = jnp.sum(p * t)
    dice = (2.0 * inter + smooth) / (jnp.sum(p) + jnp.sum(t) + smooth)
    return 1.0 - dice


if __name__ == "__main__":
    # DiceLoss has no trainable parameters (weight/size_average are unused).
    key = jax.random.PRNGKey(0)

    test_shapes = [
        (2, 4, 16, 16),    # numel 2048: tiny single full-extent block
        (2, 3, 7, 9),      # numel 378: lane-pad + masked tail, rows % 8 != 0
        (2, 4, 32, 32),    # numel 8192: rows=64 -> two 32-row blocks (nb=2)
        (4, 4, 128, 144),  # numel 294912: chunked inner loop + masked partial last block
    ]
    loss = None
    for shape in test_shapes:
        k1, k2, key = jax.random.split(key, 3)
        x = jax.random.normal(k1, shape, dtype=jnp.float32)
        tgt = (jax.random.uniform(k2, shape) > 0.5).astype(jnp.float32)

        loss = jax.block_until_ready(dice_loss(x, tgt, smooth=1.0))
        ref = jax.block_until_ready(dice_loss_ref(x, tgt, smooth=1.0))
        assert jnp.allclose(loss, ref, rtol=1e-5, atol=5e-5), (shape, loss, ref)

    print("KERNEL_OK")
</pallas_src>

<mosaic_0001>
module attributes {stable_mosaic.version = 11 : i64} {
  func.func @_dice_partials_kernel(%arg0: i32, %arg1: memref<16x128xf32, #tpu.memory_space<vmem>>, %arg2: memref<16x128xf32, #tpu.memory_space<vmem>>, %arg3: memref<1x3x8x128xf32, #tpu.memory_space<vmem>>) attributes {dimension_semantics = [#tpu.dimension_semantics<parallel>], iteration_bounds = array<i64: 1>, scalar_prefetch = 0 : i64, scratch_operands = 0 : i64, tpu.core_type = #tpu.core_type<tc>, window_params = [{transform_indices = @transform_0, window_bounds = array<i64: 16, 128>}, {transform_indices = @transform_1, window_bounds = array<i64: 16, 128>}, {transform_indices = @transform_2, window_bounds = array<i64: 1, 3, 8, 128>}]} {
    %cst = arith.constant 0.000000e+00 : f32
    %0 = vector.broadcast %cst : f32 to vector<8x128xf32>
    %c0 = arith.constant 0 : index
    %c0_0 = arith.constant 0 : index
    %1 = vector.load %arg1[%c0, %c0_0] : memref<16x128xf32, #tpu.memory_space<vmem>>, vector<16x128xf32>
    %c0_1 = arith.constant 0 : index
    %c0_2 = arith.constant 0 : index
    %2 = vector.load %arg2[%c0_1, %c0_2] : memref<16x128xf32, #tpu.memory_space<vmem>>, vector<16x128xf32>
    %cst_3 = arith.constant 5.000000e-01 : f32
    %3 = vector.broadcast %cst_3 : f32 to vector<16x128xf32>
    %4 = arith.mulf %3, %1 : vector<16x128xf32>
    %5 = math.tanh %4 : vector<16x128xf32>
    %cst_4 = arith.constant 1.000000e+00 : f32
    %6 = vector.broadcast %cst_4 : f32 to vector<16x128xf32>
    %7 = arith.addf %5, %6 : vector<16x128xf32>
    %cst_5 = arith.constant 5.000000e-01 : f32
    %8 = vector.broadcast %cst_5 : f32 to vector<16x128xf32>
    %9 = arith.mulf %8, %7 : vector<16x128xf32>
    %10 = arith.mulf %9, %2 : vector<16x128xf32>
    %11 = vector.shape_cast %10 : vector<16x128xf32> to vector<2x8x128xf32>
    %cst_6 = arith.constant dense<0.000000e+00> : vector<8x128xf32>
    %12 = vector.multi_reduction <add>, %11, %cst_6 [0] : vector<2x8x128xf32> to vector<8x128xf32>
    %13 = arith.addf %0, %12 : vector<8x128xf32>
    %14 = vector.shape_cast %9 : vector<16x128xf32> to vector<2x8x128xf32>
    %cst_7 = arith.constant dense<0.000000e+00> : vector<8x128xf32>
    %15 = vector.multi_reduction <add>, %14, %cst_7 [0] : vector<2x8x128xf32> to vector<8x128xf32>
    %16 = arith.addf %0, %15 : vector<8x128xf32>
    %17 = vector.shape_cast %2 : vector<16x128xf32> to vector<2x8x128xf32>
    %cst_8 = arith.constant dense<0.000000e+00> : vector<8x128xf32>
    %18 = vector.multi_reduction <add>, %17, %cst_8 [0] : vector<2x8x128xf32> to vector<8x128xf32>
    %19 = arith.addf %0, %18 : vector<8x128xf32>
    %c0_9 = arith.constant 0 : index
    %c0_10 = arith.constant 0 : index
    %c0_11 = arith.constant 0 : index
    %c0_12 = arith.constant 0 : index
    %20 = vector.load %arg3[%c0_9, %c0_10, %c0_11, %c0_12] : memref<1x3x8x128xf32, #tpu.memory_space<vmem>>, vector<1x1x8x128xf32>
    %21 = vector.shape_cast %20 : vector<1x1x8x128xf32> to vector<8x128xf32>
    %22 = vector.shape_cast %13 : vector<8x128xf32> to vector<1x1x8x128xf32>
    tpu.vector_store %arg3[%c0_9, %c0_10, %c0_11, %c0_12], %22 {strides = array<i32>} : memref<1x3x8x128xf32, #tpu.memory_space<vmem>>, vector<1x1x8x128xf32>,
    %c0_13 = arith.constant 0 : index
    %c1 = arith.constant 1 : index
    %c0_14 = arith.constant 0 : index
    %c0_15 = arith.constant 0 : index
    %23 = vector.load %arg3[%c0_13, %c1, %c0_14, %c0_15] : memref<1x3x8x128xf32, #tpu.memory_space<vmem>>, vector<1x1x8x128xf32>
    %24 = vector.shape_cast %23 : vector<1x1x8x128xf32> to vector<8x128xf32>
    %25 = vector.shape_cast %16 : vector<8x128xf32> to vector<1x1x8x128xf32>
    tpu.vector_store %arg3[%c0_13, %c1, %c0_14, %c0_15], %25 {strides = array<i32>} : memref<1x3x8x128xf32, #tpu.memory_space<vmem>>, vector<1x1x8x128xf32>,
    %c0_16 = arith.constant 0 : index
    %c2 = arith.constant 2 : index
    %c0_17 = arith.constant 0 : index
    %c0_18 = arith.constant 0 : index
    %26 = vector.load %arg3[%c0_16, %c2, %c0_17, %c0_18] : memref<1x3x8x128xf32, #tpu.memory_space<vmem>>, vector<1x1x8x128xf32>
    %27 = vector.shape_cast %26 : vector<1x1x8x128xf32> to vector<8x128xf32>
    %28 = vector.shape_cast %19 : vector<8x128xf32> to vector<1x1x8x128xf32>
    tpu.vector_store %arg3[%c0_16, %c2, %c0_17, %c0_18], %28 {strides = array<i32>} : memref<1x3x8x128xf32, #tpu.memory_space<vmem>>, vector<1x1x8x128xf32>,
    return
  }
  func.func @transform_0(%arg0: i32) -> (i32, i32) {
    %c0_i32 = arith.constant 0 : i32
    %c0_i32_0 = arith.constant 0 : i32
    return %arg0, %c0_i32 : i32, i32
  }
  func.func @transform_1(%arg0: i32) -> (i32, i32) {
    %c0_i32 = arith.constant 0 : i32
    %c0_i32_0 = arith.constant 0 : i32
    return %arg0, %c0_i32 : i32, i32
  }
  func.func @transform_2(%arg0: i32) -> (i32, i32, i32, i32) {
    %c0_i32 = arith.constant 0 : i32
    %c0_i32_0 = arith.constant 0 : i32
    %c0_i32_1 = arith.constant 0 : i32
    %c0_i32_2 = arith.constant 0 : i32
    return %arg0, %c0_i32, %c0_i32_0, %c0_i32_1 : i32, i32, i32, i32
  }
}

</mosaic_0001>

<llo_original>
// kernel: tpu_custom_call.1
$region0: #{tpu_custom_call.1}
  #allocation0 [shape = 'u32[]', space=smem, size = 0x4, offset = 0x4, fixed_abs, tag = 'smem constant byte address 0x4 - core index']
  #allocation1 [shape = 'u32[72,128]{1,0:T(1,128)}', space=vmem, size = 0x9000, scoped, tag = 'internal scratch']
  %s0 = inlined_call_operand.hbm [shape: f32[16,128], index: 0, kind: input, shape index: {}]
  %s1 = inlined_call_operand.hbm [shape: f32[16,128], index: 1, kind: input, shape index: {}]
  %s2 = inlined_call_operand.hbm [shape: f32[1,3,8,128], index: 2, kind: output, shape index: {}]
  %s3 = sld [smem:[#allocation0]]
  $region26: #{tpu_custom_call.1} parent=0
    _
  %s5 = ssub.s32 1, %s3
  %s6 = scalar_select 0, %s5, %s3
  $region1: #{tpu_custom_call.1} parent=0
    #allocation2 [shape = 'u8[8192]{0}', space=vmem, size = 0x2000, scoped, tag = 'input window, operand 0, single buffered']
    #allocation3 [shape = 's32[1]{0}', space=sflag, size = 0x4, scoped, tag = 'scoped memory for tpu_custom_call.1']
    #allocation4 [shape = 's32[1]{0}', space=sflag, size = 0x4, scoped, tag = 'scoped memory for tpu_custom_call.1']
    #allocation5 [shape = 'u8[8192]{0}', space=vmem, size = 0x2000, scoped, tag = 'input window, operand 1, single buffered']
    #allocation6 [shape = 's32[1]{0}', space=sflag, size = 0x4, scoped, tag = 'scoped memory for tpu_custom_call.1']
    #allocation7 [shape = 'u8[12288]{0}', space=vmem, size = 0x3000, scoped, tag = 'output window, operand 0, single buffered']
    %7 = vsyncpa [#allocation3], 0
    %8 = vsyncpa [#allocation6], 0
    %9 = vsyncpa [#allocation4], 0
    // Predicated region
    $region2: #{tpu_custom_call.1} parent=1 // pred_check
      _
    $region3: #{tpu_custom_call.1} parent=1 // pred_check_branch
      %11 = sbr.rel (0) target = $region5
    $region4: #{tpu_custom_call.1} parent=1 // pred_region
      %13 = vsyncadd [#allocation3], 0
      %s14 = sshll.u32 %s0, 4
      %s15 = int_to_ptr.hbm [resolvable:$true] %s14
      %s16 = sshll.u32 [#allocation2], 4
      %s17 = int_to_ptr.vmem [resolvable:$true] %s16
      %22 = dma.hbm_to_vmem [thread:$0]  %s15, 256, %s17, [#allocation3], 128, 128, 8
    $region5: #{tpu_custom_call.1} parent=1 // pred_fallthru
      _
    // Predicated region
    $region6: #{tpu_custom_call.1} parent=1 // pred_check
      _
    $region7: #{tpu_custom_call.1} parent=1 // pred_check_branch
      %24 = sbr.rel (0) target = $region9
    $region8: #{tpu_custom_call.1} parent=1 // pred_region
      %26 = vsyncadd [#allocation6], 0
      %s27 = sshll.u32 %s1, 4
      %s28 = int_to_ptr.hbm [resolvable:$true] %s27
      %s29 = sshll.u32 [#allocation5], 4
      %s30 = int_to_ptr.vmem [resolvable:$true] %s29
      %35 = dma.hbm_to_vmem [thread:$0]  %s28, 256, %s30, [#allocation6], 128, 128, 8
    $region9: #{tpu_custom_call.1} parent=1 // pred_fallthru
      _
    // Predicated region
    $region10: #{tpu_custom_call.1} parent=1 // pred_check
      _
    $region11: #{tpu_custom_call.1} parent=1 // pred_check_branch
      %37 = sbr.rel (0) target = $region13
    $region12: #{tpu_custom_call.1} parent=1 // pred_region
      %39 = dma.done [#allocation3], 256
    $region13: #{tpu_custom_call.1} parent=1 // pred_fallthru
      _
    // Predicated region
    $region14: #{tpu_custom_call.1} parent=1 // pred_check
      _
    $region15: #{tpu_custom_call.1} parent=1 // pred_check_branch
      %41 = sbr.rel (0) target = $region17
    $region16: #{tpu_custom_call.1} parent=1 // pred_region
      %43 = dma.done [#allocation6], 256
    $region17: #{tpu_custom_call.1} parent=1 // pred_fallthru
      _
    %v44 = vld [vmem:[#allocation2] sm:$0xff]
    %v45 = vld [vmem:[#allocation2 + $0x8] sm:$0xff]
    %v46 = vld [vmem:[#allocation5] sm:$0xff]
    %v47 = vld [vmem:[#allocation5 + $0x8] sm:$0xff]
    %v48 = vmul.f32 %v44, 0.5
    %v49 = vmul.f32 %v45, 0.5
    %v50 = vtanh.pop %v48
    %v51 = vtanh.pop %v49
    %v52 = vadd.f32 %v50, 1.0
    %v53 = vadd.f32 %v51, 1.0
    %v54 = vmul.f32 %v52, 0.5
    %v55 = vmul.f32 %v53, 0.5
    %v56 = vmul.f32 %v54, %v46
    %v57 = vmul.f32 %v55, %v47
    %v58 = vadd.f32 %v56, %v57
    %v59 = vadd.f32 %v58, 0.0
    %v60 = vadd.f32 %v54, %v55
    %v61 = vadd.f32 %v60, 0.0
    %v62 = vadd.f32 %v46, %v47
    %v63 = vadd.f32 %v62, 0.0
    %64 = vst [vmem:[#allocation7] sm:$0xff] %v59
    %s65 = scalar_lea.vmem [#allocation7], 8
    %66 = vst [vmem:[%s65] sm:$0xff] %v61
    %s67 = scalar_lea.vmem [#allocation7], 16
    %68 = vst [vmem:[%s67] sm:$0xff] %v63
    // Predicated region
    $region18: #{tpu_custom_call.1} parent=1 // pred_check
      _
    $region19: #{tpu_custom_call.1} parent=1 // pred_check_branch
      %70 = sbr.rel (0) target = $region21
    $region20: #{tpu_custom_call.1} parent=1 // pred_region
      %72 = vsyncadd [#allocation4], 0
      %s73 = sshll.u32 [#allocation7], 4
      %s74 = int_to_ptr.vmem [resolvable:$true] %s73
      %s75 = sshll.u32 %s2, 4
      %s76 = int_to_ptr.hbm [resolvable:$true] %s75
      %81 = dma.vmem_to_hbm [thread:$0]  %s74, 384, %s76, [#allocation4], 128, 128, 8
    $region21: #{tpu_custom_call.1} parent=1 // pred_fallthru
      _
    // Predicated region
    $region22: #{tpu_custom_call.1} parent=1 // pred_check
      _
    $region23: #{tpu_custom_call.1} parent=1 // pred_check_branch
      %83 = sbr.rel (0) target = $region25
    $region24: #{tpu_custom_call.1} parent=1 // pred_region
      %85 = dma.done [#allocation4], 384
    $region25: #{tpu_custom_call.1} parent=1 // pred_fallthru
      _
    %86 = vsyncpa [#allocation3], 1
    %87 = vsyncpa [#allocation6], 1
    %88 = vsyncpa [#allocation4], 1

</llo_original>
